<compile_context>
chip_gen: v7x
topology: tpu7x:2x2x1
jax: 0.10.0
libtpu: 0.0.40
codegen_flags: <defaults>
</compile_context>

<pallas_src>
import math
import functools

import numpy as np
import jax
import jax.numpy as jnp
from jax.experimental import pallas as pl
from jax.experimental.pallas import tpu as pltpu

_LANE = 128
_SUB = 16            # bf16-friendly sublane quantum


def _round_up(x, q):
    return ((x + q - 1) // q) * q


def _tpu_generation():
    """Best-effort TPU generation (5 = v5e/v5p, 6 = v6e, 7 = v7x)."""
    try:
        kind = jax.devices()[0].device_kind.lower()
    except Exception:
        return 6
    for g in (7, 6, 5, 4, 3):
        if f"v{g}" in kind:
            return g
    return 6


# --------------------------------------------------------------------------
# Kernel 1: random scalar displacement fields
#   dx = S @ (scale*C_u)^T @ S^T ; dy likewise (scale = sqrt(T)*n, folded into C).
# Blocked over output rows so large n stays within v7x's 64 MiB VMEM.
# --------------------------------------------------------------------------
def _field_kernel(s_ref, cT_ref, sT_ref, dxy_ref):
    s = s_ref[...]                                                  # (rblk, cpad)
    bu = jnp.dot(s, cT_ref[0], preferred_element_type=jnp.float32)
    bv = jnp.dot(s, cT_ref[1], preferred_element_type=jnp.float32)
    dxy_ref[0] = jnp.dot(bu, sT_ref[...], preferred_element_type=jnp.float32)
    dxy_ref[1] = jnp.dot(bv, sT_ref[...], preferred_element_type=jnp.float32)


def _pick_field_rows(n):
    """Largest multiple of 8 dividing n, capped at 256; else the full n."""
    best = None
    r = 8
    while r <= min(256, n):
        if n % r == 0:
            best = r
        r += 8
    return best if best is not None else n


def _displacement_fields(s, c_u, c_v):
    """c_u / c_v already carry the sqrt(T)*n scale (device scalar)."""
    n, m = s.shape
    cpad = max(_LANE, _round_up(m, _LANE))      # pad the tiny mode axis to lane width
    s_pad = jnp.zeros((n, cpad), jnp.float32).at[:, :m].set(s)
    cT = (jnp.zeros((2, cpad, cpad), jnp.float32)
          .at[0, :m, :m].set(c_u.T)
          .at[1, :m, :m].set(c_v.T))
    sT = s_pad.T                                                    # (cpad, n)

    rblk = _pick_field_rows(n)
    return pl.pallas_call(
        _field_kernel,
        out_shape=jax.ShapeDtypeStruct((2, n, n), jnp.float32),
        grid=(n // rblk,),
        in_specs=[pl.BlockSpec((rblk, cpad), lambda i: (i, 0)),
                  pl.BlockSpec((2, cpad, cpad), lambda i: (0, 0, 0)),
                  pl.BlockSpec((cpad, n), lambda i: (0, 0))],
        out_specs=pl.BlockSpec((2, rblk, n), lambda i: (0, i, 0)),
        compiler_params=pltpu.CompilerParams(dimension_semantics=("parallel",)),
    )(s_pad, cT, sT)


# --------------------------------------------------------------------------
# Kernel 2: band-limited, factorized bilinear remap
#   grid = (bc_tiles, out_pixel_tiles, band_row_blocks)       (reduction last)
#   per step:  t = a(row block, all bc) @ wx   (MXU, M = rb*bc_t, K = n)
#              acc += sum_over_rows( wy_row * t_row )          (rank-2 VPU epilogue)
#   wx[xi, r] = max(0, 1-|xi - xn_r|),  wy[yi, r] = max(0, 1-|yi - yn_r|)
# --------------------------------------------------------------------------
def _remap_kernel(lo_ref, hi_ref, xnyn_ref, a_ref, o_ref, acc_ref, wx_ref, *, rb):
    j = pl.program_id(1)          # output-pixel tile
    k = pl.program_id(2)          # band row block (reduction)
    nk = pl.num_programs(2)

    n = a_ref.shape[-1]
    bc_t = o_ref.shape[0]

    # Per output-tile init: zero the accumulator and build the column ("x") hat
    # weights once; they are shared by every input row block of this tile.
    @pl.when(k == 0)
    def _init():
        acc_ref[...] = jnp.zeros_like(acc_ref)
        xn = xnyn_ref[0:1, :]                                       # (1, tr)
        cols = jax.lax.broadcasted_iota(jnp.int32, (n, xn.shape[1]), 0)
        wx = jnp.maximum(0.0, 1.0 - jnp.abs(cols.astype(jnp.float32) - xn))
        wx_ref[...] = wx.astype(wx_ref.dtype)

    kb = lo_ref[j] + k            # absolute input row block (band starts at lo)
    in_band = kb <= hi_ref[j]

    @pl.when(in_band)
    def _accumulate():
        a2 = a_ref[0, 0]                                            # (rb*bc_t, n)
        t = jnp.dot(a2, wx_ref[...],
                    preferred_element_type=jnp.float32)             # (rb*bc_t, tr)

        yn = xnyn_ref[1:2, :]                                       # (1, tr)
        base = (kb * rb).astype(jnp.float32)

        wy = jnp.maximum(0.0, 1.0 - jnp.abs(base - yn))
        contrib = t[0:bc_t, :] * wy
        for rloc in range(1, rb):
            wy = jnp.maximum(0.0, 1.0 - jnp.abs(base + jnp.float32(rloc) - yn))
            contrib = contrib + t[rloc * bc_t:(rloc + 1) * bc_t, :] * wy
        acc_ref[...] += contrib

    @pl.when(k == nk - 1)
    def _finalize():
        o_ref[...] = acc_ref[...].astype(o_ref.dtype)


def _remap(img3, dxy, *, matmul_dtype=jnp.bfloat16):
    """img3: (BC, n, n) f32 image stack, dxy: (2, n, n) f32 displacement fields."""
    BC, n, _ = img3.shape
    n2 = n * n
    gen = _tpu_generation()

    # ---------------- static tiling ----------------
    tr = min(512, _round_up(n2, _LANE))          # output-pixel tile (lanes)
    n2p = _round_up(n2, tr)                      # padded flattened output axis
    nj = n2p // tr

    rb = max(_SUB, ((2048 // max(n, 1)) // _SUB) * _SUB)   # rows per reduction block
    rb = min(rb, _round_up(n, _SUB))
    nr_pad = _round_up(n, rb)                    # padded input rows (zero rows are inert)
    nk_a = nr_pad // rb

    bc_cap = 256 if gen >= 6 else 128            # 256-wide MXU on v6e/v7x, 128 on v5e
    bc_pad = _round_up(BC, _SUB)
    if bc_pad <= bc_cap:
        bc_t = bc_pad
    else:
        bc_t = bc_cap
        bc_pad = _round_up(bc_pad, bc_cap)
    nbc = bc_pad // bc_t

    # ---- tiny XLA precompute: exact warp targets + per-tile input-row bands ----
    dxy2 = dxy.reshape(2, n2)
    idx = jnp.arange(n2p, dtype=jnp.int32)       # integer coords: exact for any n
    xo = (idx % n).astype(jnp.float32)
    yo = (idx // n).astype(jnp.float32)
    dx = jnp.zeros((n2p,), jnp.float32).at[:n2].set(dxy2[0])
    dy = jnp.zeros((n2p,), jnp.float32).at[:n2].set(dxy2[1])
    fmax = jnp.float32(n - 1)
    xn = jnp.clip(xo - dx, 0.0, fmax)
    yn = jnp.clip(yo - dy, 0.0, fmax)
    xnyn = jnp.stack([xn, yn], axis=0)           # (2, n2p) f32

    yn_t = yn.reshape(nj, tr)
    lo = jnp.floor(jnp.min(yn_t, axis=1)).astype(jnp.int32) // rb
    hi = jnp.ceil(jnp.max(yn_t, axis=1)).astype(jnp.int32) // rb

    # Band-limited reduction axis: one cheap host read of the widest band shrinks
    # the grid from nk_a steps to just the rows actually touched.  Falls back to
    # the full-length (still exact) axis when tracing under jit.
    nk = nk_a
    if nk_a > 8:
        try:
            nk = min(nk_a, int(jax.device_get(jnp.max(hi - lo))) + 1)
        except Exception:
            nk = nk_a

    # ---- image: pad + pre-collapse into (row_block, bc_block, rb*bc_t, n) ----
    a = (jnp.zeros((bc_pad, nr_pad, n), matmul_dtype)
         .at[:BC, :n, :].set(img3.astype(matmul_dtype)))
    a = (a.reshape(nbc, bc_t, nk_a, rb, n)
          .transpose(2, 0, 3, 1, 4)
          .reshape(nk_a, nbc, rb * bc_t, n))

    # ---------------- VMEM budget ----------------
    it = jnp.dtype(matmul_dtype).itemsize
    est_vmem = (2 * 2 * tr * 4                   # xn/yn block (double-buffered)
                + 2 * rb * bc_t * n * it         # image block (double-buffered)
                + 2 * bc_t * tr * 4              # output block (double-buffered)
                + bc_t * tr * 4                  # f32 accumulator
                + n * tr * it                    # wx scratch
                + rb * bc_t * tr * 4)            # f32 matmul temporary
    default_limit = (16 if gen <= 5 else 32) * 1024 * 1024
    hard_cap = (48 if gen >= 7 else 64) * 1024 * 1024     # v7x: 64 MiB physical VMEM
    cparams = dict(dimension_semantics=("parallel", "parallel", "arbitrary"))
    if est_vmem > int(0.75 * default_limit):
        cparams["vmem_limit_bytes"] = int(min(max(2 * est_vmem, default_limit), hard_cap))

    out = pl.pallas_call(
        functools.partial(_remap_kernel, rb=rb),
        out_shape=jax.ShapeDtypeStruct((bc_pad, n2p), jnp.float32),
        grid_spec=pltpu.PrefetchScalarGridSpec(
            num_scalar_prefetch=2,
            grid=(nbc, nj, nk),
            in_specs=[
                pl.BlockSpec((2, tr), lambda bi, j, k, lo_r, hi_r: (0, j)),
                pl.BlockSpec((1, 1, rb * bc_t, n),
                             lambda bi, j, k, lo_r, hi_r:
                             (jnp.minimum(lo_r[j] + k, nk_a - 1), bi, 0, 0)),
            ],
            out_specs=pl.BlockSpec((bc_t, tr),
                                   lambda bi, j, k, lo_r, hi_r: (bi, j)),
            scratch_shapes=[pltpu.VMEM((bc_t, tr), jnp.float32),
                            pltpu.VMEM((n, tr), matmul_dtype)],
        ),
        compiler_params=pltpu.CompilerParams(**cparams),
    )(lo, hi, xnyn, a)
    return out[:BC, :n2].reshape(BC, n, n)


# --------------------------------------------------------------------------
# Plain-JAX glue (parameter setup / sampling), mirroring the reference module.
# --------------------------------------------------------------------------
def temperature_range(n, cut):
    cut = cut + 1e-6
    log = jnp.log(cut)
    T1 = 1.0 / (math.pi * n ** 2 * log)
    T2 = 4.0 / (math.pi ** 3 * cut ** 2 * log)
    return T1, T2


class Diffeo:
    """JAX/Pallas port of the `Diffeo` augmentation (forward pass)."""

    def __init__(self, sT, rT, scut, rcut, cutmin, cutmax):
        self.sT, self.rT = sT, rT
        self.scut, self.rcut = scut, rcut
        self.cutmin, self.cutmax = cutmin, cutmax
        self._aT = sT - sT / (rT + 1)
        self._bT = sT / (rT + 1)
        self._acut = scut - scut / (rcut + 1)
        self._bcut = scut / (rcut + 1)

    def __call__(self, img, key):
        n = img.shape[-1]
        assert img.shape[-2] == n, "Image(s) should be square."
        k_cut, k_T, k_u, k_v = jax.random.split(key, 4)
        m = int(self.cutmax)                     # static mode count -> no retrace

        # cut and T stay on device (no host sync): modes allocated at cutmax and
        # masked above the sampled cut (masked modes get zero coefficients).
        cut = jnp.floor(jax.random.beta(k_cut, self._acut, self._bcut)
                        * (self.cutmax + 1 - self.cutmin) + self.cutmin)
        T1, T2 = temperature_range(n, cut)
        T = jax.random.beta(k_T, self._aT, self._bT) * (T2 - T1) + T1
        scale = jnp.sqrt(T) * n                  # folded into the mode coefficients

        kvec = jnp.arange(1, m + 1, dtype=jnp.float32)
        ki, kj = jnp.meshgrid(kvec, kvec, indexing='ij')
        rad = jnp.sqrt(ki * ki + kj * kj)
        e = jnp.where(rad < cut + 0.5, 1.0 / rad, 0.0)       # band-limit mask
        x = jnp.linspace(0.0, 1.0, n, dtype=jnp.float32)
        s = jnp.sin(math.pi * x[:, None] * kvec[None, :])    # (n, cutmax)

        c_u = jax.random.normal(k_u, (m, m), jnp.float32) * e * scale
        c_v = jax.random.normal(k_v, (m, m), jnp.float32) * e * scale

        dxy = _displacement_fields(s, c_u, c_v)              # Pallas kernel 1

        lead = img.shape[:-2]
        BC = int(math.prod(lead)) if lead else 1
        out = _remap(img.reshape(BC, n, n).astype(jnp.float32), dxy)  # kernel 2

        self._last_field = dxy
        self._last_params = (s, c_u, c_v)
        return out.reshape(*lead, n, n).astype(img.dtype)


# --------------------------------------------------------------------------
# Pure-JAX reference for verification (gather-based bilinear remap).
# --------------------------------------------------------------------------
def _remap_reference(a, dx, dy):
    n = a.shape[-1]
    y, x = jnp.meshgrid(jnp.arange(n, dtype=jnp.float32),
                        jnp.arange(n, dtype=jnp.float32), indexing='ij')
    xn = jnp.clip(x - dx, 0.0, n - 1.0)
    yn = jnp.clip(y - dy, 0.0, n - 1.0)
    xf = jnp.floor(xn); xc = jnp.ceil(xn)
    yf = jnp.floor(yn); yc = jnp.ceil(yn)
    xv = xn - xf; yv = yn - yf
    xf = xf.astype(jnp.int32); xc = xc.astype(jnp.int32)
    yf = yf.astype(jnp.int32); yc = yc.astype(jnp.int32)

    def g(yi, xi):
        return a[..., yi, xi]

    return ((1 - yv) * (1 - xv) * g(yf, xf) + (1 - yv) * xv * g(yf, xc)
            + yv * (1 - xv) * g(yc, xf) + yv * xv * g(yc, xc))


if __name__ == "__main__":
    key = jax.random.PRNGKey(0)
    kA_img, kA, kB_img, kB, kC_img, kC = jax.random.split(key, 6)

    diffeo = Diffeo(sT=1.0, rT=1.0, scut=1.0, rcut=1.0, cutmin=2, cutmax=6)

    # --- case 1: NCHW batch, n=16 ----------------------------------------
    imgA = jax.random.normal(kA_img, (2, 4, 16, 16), dtype=jnp.float32)
    outA = jax.block_until_ready(diffeo(imgA, kA))
    assert outA.shape == imgA.shape and outA.dtype == imgA.dtype

    # Displacement-field kernel vs einsum reference (f32 matmul).
    s, c_u, c_v = diffeo._last_params
    dxyA = diffeo._last_field
    dx_ref = jnp.einsum('ij,xi,yj->yx', c_u, s, s)
    dy_ref = jnp.einsum('ij,xi,yj->yx', c_v, s, s)
    np.testing.assert_allclose(np.asarray(dxyA[0]), np.asarray(dx_ref),
                               rtol=1e-2, atol=1e-3)
    np.testing.assert_allclose(np.asarray(dxyA[1]), np.asarray(dy_ref),
                               rtol=1e-2, atol=1e-3)

    # Remap kernel vs gather reference with the same dx/dy (bf16 MXU operands
    # with f32 accumulation, hence the loosened tolerance).
    refA = _remap_reference(imgA, dxyA[0], dxyA[1])
    np.testing.assert_allclose(np.asarray(outA), np.asarray(refA),
                               rtol=2e-2, atol=3e-2)

    # --- case 2: n=64, multi-block reduction axis --------------------------
    imgB = jax.random.normal(kB_img, (1, 1, 64, 64), dtype=jnp.float32)
    outB = jax.block_until_ready(diffeo(imgB, kB))
    dxyB = diffeo._last_field
    refB = _remap_reference(imgB, dxyB[0], dxyB[1])
    np.testing.assert_allclose(np.asarray(outB), np.asarray(refB),
                               rtol=2e-2, atol=3e-2)

    # --- case 3: n=256, exercises the shortened (band-limited) reduction axis ---
    imgC = jax.random.normal(kC_img, (2, 256, 256), dtype=jnp.float32)
    outC = jax.block_until_ready(diffeo(imgC, kC))
    dxyC = diffeo._last_field
    refC = _remap_reference(imgC, dxyC[0], dxyC[1])
    np.testing.assert_allclose(np.asarray(outC), np.asarray(refC),
                               rtol=2e-2, atol=3e-2)

    print("KERNEL_OK")
</pallas_src>

<mosaic_0001>
module attributes {stable_mosaic.version = 11 : i64} {
  func.func @_field_kernel(%arg0: i32, %arg1: memref<16x128xf32, #tpu.memory_space<vmem>>, %arg2: memref<2x128x128xf32, #tpu.memory_space<vmem>>, %arg3: memref<128x16xf32, #tpu.memory_space<vmem>>, %arg4: memref<2x16x16xf32, #tpu.memory_space<vmem>>) attributes {dimension_semantics = [#tpu.dimension_semantics<parallel>], iteration_bounds = array<i64: 1>, scalar_prefetch = 0 : i64, scratch_operands = 0 : i64, tpu.core_type = #tpu.core_type<tc>, window_params = [{transform_indices = @transform_0, window_bounds = array<i64: 16, 128>}, {pipeline_mode = #tpu.pipeline_mode<synchronous>, transform_indices = @transform_1, window_bounds = array<i64: 2, 128, 128>}, {pipeline_mode = #tpu.pipeline_mode<synchronous>, transform_indices = @transform_2, window_bounds = array<i64: 128, 16>}, {transform_indices = @transform_3, window_bounds = array<i64: 2, 16, 16>}]} {
    %c0 = arith.constant 0 : index
    %c0_0 = arith.constant 0 : index
    %0 = vector.load %arg1[%c0, %c0_0] : memref<16x128xf32, #tpu.memory_space<vmem>>, vector<16x128xf32>
    %c0_1 = arith.constant 0 : index
    %c0_2 = arith.constant 0 : index
    %c0_3 = arith.constant 0 : index
    %1 = vector.load %arg2[%c0_1, %c0_2, %c0_3] : memref<2x128x128xf32, #tpu.memory_space<vmem>>, vector<1x128x128xf32>
    %2 = vector.shape_cast %1 : vector<1x128x128xf32> to vector<128x128xf32>
    %cst = arith.constant dense<0.000000e+00> : vector<16x128xf32>
    %3 = tpu.matmul %0, %2, %cst {dimension_numbers = #tpu.dot_dimension_numbers<[1], [0], [0], [1], [0, 0, 1, 1], [], []>} : vector<16x128xf32>, vector<128x128xf32>, vector<16x128xf32> -> vector<16x128xf32>
    %c1 = arith.constant 1 : index
    %c0_4 = arith.constant 0 : index
    %c0_5 = arith.constant 0 : index
    %4 = vector.load %arg2[%c1, %c0_4, %c0_5] : memref<2x128x128xf32, #tpu.memory_space<vmem>>, vector<1x128x128xf32>
    %5 = vector.shape_cast %4 : vector<1x128x128xf32> to vector<128x128xf32>
    %cst_6 = arith.constant dense<0.000000e+00> : vector<16x128xf32>
    %6 = tpu.matmul %0, %5, %cst_6 {dimension_numbers = #tpu.dot_dimension_numbers<[1], [0], [0], [1], [0, 0, 1, 1], [], []>} : vector<16x128xf32>, vector<128x128xf32>, vector<16x128xf32> -> vector<16x128xf32>
    %c0_7 = arith.constant 0 : index
    %c0_8 = arith.constant 0 : index
    %7 = vector.load %arg3[%c0_7, %c0_8] : memref<128x16xf32, #tpu.memory_space<vmem>>, vector<128x16xf32>
    %cst_9 = arith.constant dense<0.000000e+00> : vector<16x16xf32>
    %8 = tpu.matmul %3, %7, %cst_9 {dimension_numbers = #tpu.dot_dimension_numbers<[1], [0], [0], [1], [0, 0, 1, 1], [], []>} : vector<16x128xf32>, vector<128x16xf32>, vector<16x16xf32> -> vector<16x16xf32>
    %c0_10 = arith.constant 0 : index
    %c0_11 = arith.constant 0 : index
    %c0_12 = arith.constant 0 : index
    %9 = vector.load %arg4[%c0_10, %c0_11, %c0_12] : memref<2x16x16xf32, #tpu.memory_space<vmem>>, vector<1x16x16xf32>
    %10 = vector.shape_cast %9 : vector<1x16x16xf32> to vector<16x16xf32>
    %11 = vector.shape_cast %8 : vector<16x16xf32> to vector<1x16x16xf32>
    tpu.vector_store %arg4[%c0_10, %c0_11, %c0_12], %11 {strides = array<i32>} : memref<2x16x16xf32, #tpu.memory_space<vmem>>, vector<1x16x16xf32>,
    %c0_13 = arith.constant 0 : index
    %c0_14 = arith.constant 0 : index
    %12 = vector.load %arg3[%c0_13, %c0_14] : memref<128x16xf32, #tpu.memory_space<vmem>>, vector<128x16xf32>
    %cst_15 = arith.constant dense<0.000000e+00> : vector<16x16xf32>
    %13 = tpu.matmul %6, %12, %cst_15 {dimension_numbers = #tpu.dot_dimension_numbers<[1], [0], [0], [1], [0, 0, 1, 1], [], []>} : vector<16x128xf32>, vector<128x16xf32>, vector<16x16xf32> -> vector<16x16xf32>
    %c1_16 = arith.constant 1 : index
    %c0_17 = arith.constant 0 : index
    %c0_18 = arith.constant 0 : index
    %14 = vector.load %arg4[%c1_16, %c0_17, %c0_18] : memref<2x16x16xf32, #tpu.memory_space<vmem>>, vector<1x16x16xf32>
    %15 = vector.shape_cast %14 : vector<1x16x16xf32> to vector<16x16xf32>
    %16 = vector.shape_cast %13 : vector<16x16xf32> to vector<1x16x16xf32>
    tpu.vector_store %arg4[%c1_16, %c0_17, %c0_18], %16 {strides = array<i32>} : memref<2x16x16xf32, #tpu.memory_space<vmem>>, vector<1x16x16xf32>,
    return
  }
  func.func @transform_0(%arg0: i32) -> (i32, i32) {
    %c0_i32 = arith.constant 0 : i32
    %c0_i32_0 = arith.constant 0 : i32
    return %arg0, %c0_i32 : i32, i32
  }
  func.func @transform_1(%arg0: i32) -> (i32, i32, i32) {
    %c0_i32 = arith.constant 0 : i32
    %c0_i32_0 = arith.constant 0 : i32
    %c0_i32_1 = arith.constant 0 : i32
    %c0_i32_2 = arith.constant 0 : i32
    return %c0_i32, %c0_i32_0, %c0_i32_1 : i32, i32, i32
  }
  func.func @transform_2(%arg0: i32) -> (i32, i32) {
    %c0_i32 = arith.constant 0 : i32
    %c0_i32_0 = arith.constant 0 : i32
    %c0_i32_1 = arith.constant 0 : i32
    return %c0_i32, %c0_i32_0 : i32, i32
  }
  func.func @transform_3(%arg0: i32) -> (i32, i32, i32) {
    %c0_i32 = arith.constant 0 : i32
    %c0_i32_0 = arith.constant 0 : i32
    %c0_i32_1 = arith.constant 0 : i32
    return %c0_i32, %arg0, %c0_i32_0 : i32, i32, i32
  }
}

</mosaic_0001>

<llo_original>
// kernel: tpu_custom_call.1
$region0: #{tpu_custom_call.1}
  #allocation0 [shape = 'u32[]', space=smem, size = 0x4, offset = 0x4, fixed_abs, tag = 'smem constant byte address 0x4 - core index']
  #allocation1 [shape = 'u32[144,128]{1,0:T(1,128)}', space=vmem, size = 0x12000, scoped, tag = 'internal scratch']
  %s0 = inlined_call_operand.vmem [shape: f32[16,128], index: 0, kind: input, shape index: {}]
  %s1 = inlined_call_operand.hbm [shape: f32[2,128,128], index: 1, kind: input, shape index: {}]
  %s2 = inlined_call_operand.vmem [shape: f32[128,16], index: 2, kind: input, shape index: {}]
  %s3 = inlined_call_operand.hbm [shape: f32[2,16,16], index: 3, kind: output, shape index: {}]
  %s4 = sld [smem:[#allocation0]]
  $region26: #{tpu_custom_call.1} parent=0
    _
  %s6 = ssub.s32 1, %s4
  %s7 = scalar_select 0, %s6, %s4
  $region1: #{tpu_custom_call.1} parent=0
    #allocation2 [shape = 'u8[131072]{0}', space=vmem, size = 0x20000, scoped, tag = 'input window, operand 1, single buffered']
    #allocation3 [shape = 's32[1]{0}', space=sflag, size = 0x4, scoped, tag = 'scoped memory for tpu_custom_call.1']
    #allocation4 [shape = 's32[1]{0}', space=sflag, size = 0x4, scoped, tag = 'scoped memory for tpu_custom_call.1']
    #allocation5 [shape = 'u8[16384]{0}', space=vmem, size = 0x4000, scoped, tag = 'output window, operand 0, single buffered']
    %8 = vsyncpa [#allocation3], 0
    %9 = vsyncpa [#allocation4], 0
    // Predicated region
    $region2: #{tpu_custom_call.1} parent=1 // pred_check
      _
    $region3: #{tpu_custom_call.1} parent=1 // pred_check_branch
      %11 = sbr.rel (0) target = $region5
    $region4: #{tpu_custom_call.1} parent=1 // pred_region
      _
    $region5: #{tpu_custom_call.1} parent=1 // pred_fallthru
      _
    // Predicated region
    $region6: #{tpu_custom_call.1} parent=1 // pred_check
      _
    $region7: #{tpu_custom_call.1} parent=1 // pred_check_branch
      %13 = sbr.rel (0) target = $region9
    $region8: #{tpu_custom_call.1} parent=1 // pred_region
      %s15 = ssub.s32 4096, 4096
      %16 = vsyncadd [#allocation3], %s15
      %s17 = sshll.u32 [#allocation2], 4
      %s18 = int_to_ptr.vmem [resolvable:$true] %s17
      %23 = dma.hbm_to_vmem [thread:$0]  %s1, 4096, %s18, [#allocation3], 128, 128, 8
    $region9: #{tpu_custom_call.1} parent=1 // pred_fallthru
      _
    // Predicated region
    $region10: #{tpu_custom_call.1} parent=1 // pred_check
      _
    $region11: #{tpu_custom_call.1} parent=1 // pred_check_branch
      %25 = sbr.rel (0) target = $region13
    $region12: #{tpu_custom_call.1} parent=1 // pred_region
      _
    $region13: #{tpu_custom_call.1} parent=1 // pred_fallthru
      _
    // Predicated region
    $region14: #{tpu_custom_call.1} parent=1 // pred_check
      _
    $region15: #{tpu_custom_call.1} parent=1 // pred_check_branch
      %27 = sbr.rel (0) target = $region17
    $region16: #{tpu_custom_call.1} parent=1 // pred_region
      %28 = dma.done [#allocation3], 4096
    $region17: #{tpu_custom_call.1} parent=1 // pred_fallthru
      _
    %v29 = vld [vmem:[%s0] sm:$0xff]
    %v30 = vld [vmem:[%s0 + $0x8] sm:$0xff]
    %v31 = vld [vmem:[#allocation2] sm:$0xff]
    %v32 = vld [vmem:[#allocation2 + $0x8] sm:$0xff]
    %v33 = vld [vmem:[#allocation2 + $0x10] sm:$0xff]
    %v34 = vld [vmem:[#allocation2 + $0x18] sm:$0xff]
    %v35 = vld [vmem:[#allocation2 + $0x20] sm:$0xff]
    %v36 = vld [vmem:[#allocation2 + $0x28] sm:$0xff]
    %v37 = vld [vmem:[#allocation2 + $0x30] sm:$0xff]
    %v38 = vld [vmem:[#allocation2 + $0x38] sm:$0xff]
    %v39 = vld [vmem:[#allocation2 + $0x40] sm:$0xff]
    %v40 = vld [vmem:[#allocation2 + $0x48] sm:$0xff]
    %v41 = vld [vmem:[#allocation2 + $0x50] sm:$0xff]
    %v42 = vld [vmem:[#allocation2 + $0x58] sm:$0xff]
    %v43 = vld [vmem:[#allocation2 + $0x60] sm:$0xff]
    %v44 = vld [vmem:[#allocation2 + $0x68] sm:$0xff]
    %v45 = vld [vmem:[#allocation2 + $0x70] sm:$0xff]
    %v46 = vld [vmem:[#allocation2 + $0x78] sm:$0xff]
    %47 = vmatprep.subr.mxu0 0.0
    %48 = vmatpush1.msra.mxu0 %v31
    %49 = vmatprep.subr.mxu0 0.0
    %50 = vmatpush1.msra.mxu0 %v32
    %51 = vmatprep.subr.mxu0 0.0
    %52 = vmatpush1.msra.mxu0 %v33
    %53 = vmatprep.subr.mxu0 0.0
    %54 = vmatpush1.msra.mxu0 %v34
    %55 = vmatprep.subr.mxu0 0.0
    %56 = vmatpush1.msra.mxu0 %v35
    %57 = vmatprep.subr.mxu0 0.0
    %58 = vmatpush1.msra.mxu0 %v36
    %59 = vmatprep.subr.mxu0 0.0
    %60 = vmatpush1.msra.mxu0 %v37
    %61 = vmatprep.subr.mxu0 0.0
    %62 = vmatpush1.msra.mxu0 %v38
    %63 = vmatprep.subr.mxu0 0.0
    %64 = vmatpush1.msra.mxu0 %v39
    %65 = vmatprep.subr.mxu0 0.0
    %66 = vmatpush1.msra.mxu0 %v40
    %67 = vmatprep.subr.mxu0 0.0
    %68 = vmatpush1.msra.mxu0 %v41
    %69 = vmatprep.subr.mxu0 0.0
    %70 = vmatpush1.msra.mxu0 %v42
    %71 = vmatprep.subr.mxu0 0.0
    %72 = vmatpush1.msra.mxu0 %v43
    %73 = vmatprep.subr.mxu0 0.0
    %74 = vmatpush1.msra.mxu0 %v44
    %75 = vmatprep.subr.mxu0 0.0
    %76 = vmatpush1.msra.mxu0 %v45
    %77 = vmatprep.subr.mxu0 0.0
    %78 = vmatpush1.msra.mxu0 %v46
    %79 = vmatprep.subr.mxu0 0.0
    %80 = vmatpush1.msra.mxu0 0.0
    %81 = vmatprep.subr.mxu0 0.0
    %82 = vmatpush1.msra.mxu0 0.0
    %83 = vmatprep.subr.mxu0 0.0
    %84 = vmatpush1.msra.mxu0 0.0
    %85 = vmatprep.subr.mxu0 0.0
    %86 = vmatpush1.msra.mxu0 0.0
    %87 = vmatprep.subr.mxu0 0.0
    %88 = vmatpush1.msra.mxu0 0.0
    %89 = vmatprep.subr.mxu0 0.0
    %90 = vmatpush1.msra.mxu0 0.0
    %91 = vmatprep.subr.mxu0 0.0
    %92 = vmatpush1.msra.mxu0 0.0
    %93 = vmatprep.subr.mxu0 0.0
    %94 = vmatpush1.msra.mxu0 0.0
    %95 = vmatprep.subr.mxu0 0.0
    %96 = vmatpush1.msra.mxu0 0.0
    %97 = vmatprep.subr.mxu0 0.0
    %98 = vmatpush1.msra.mxu0 0.0
    %99 = vmatprep.subr.mxu0 0.0
    %100 = vmatpush1.msra.mxu0 0.0
    %101 = vmatprep.subr.mxu0 0.0
    %102 = vmatpush1.msra.mxu0 0.0
    %103 = vmatprep.subr.mxu0 0.0
    %104 = vmatpush1.msra.mxu0 0.0
    %105 = vmatprep.subr.mxu0 0.0
    %106 = vmatpush1.msra.mxu0 0.0
    %107 = vmatprep.subr.mxu0 0.0
    %108 = vmatpush1.msra.mxu0 0.0
    %109 = vmatprep.subr.mxu0 0.0
    %110 = vmatpush1.msra.mxu0 0.0
    %111 = vmatprep.mubr.f32.mxu0 0.0
    %112 = vmatmul.mubr.f32.gmra.mrb[0].mxu0 %v29
    %v113 = vpop.f32.mrb[0].mxu0
    %v114 = vadd.f32 0.0, %v113
    %v115 = vpop.f32.mrb[0].mxu0
    %116 = vmatprep.mubr.f32.mxu0 0.0
    %117 = vmatmul.mubr.f32.gmra.mrb[0].mxu0 %v30
    %v118 = vpop.f32.mrb[0].mxu0
    %v119 = vadd.f32 0.0, %v118
    %v120 = vpop.f32.mrb[0].mxu0
    %121 = vdwg.mxu0
    %s122 = scalar_lea.vmem [#allocation2], 128
    %v123 = vld [vmem:[%s122] sm:$0xff]
    %v124 = vld [vmem:[%s122 + $0x8] sm:$0xff]
    %v125 = vld [vmem:[%s122 + $0x10] sm:$0xff]
    %v126 = vld [vmem:[%s122 + $0x18] sm:$0xff]
    %v127 = vld [vmem:[%s122 + $0x20] sm:$0xff]
    %v128 = vld [vmem:[%s122 + $0x28] sm:$0xff]
    %v129 = vld [vmem:[%s122 + $0x30] sm:$0xff]
    %v130 = vld [vmem:[%s122 + $0x38] sm:$0xff]
    %v131 = vld [vmem:[%s122 + $0x40] sm:$0xff]
    %v132 = vld [vmem:[%s122 + $0x48] sm:$0xff]
    %v133 = vld [vmem:[%s122 + $0x50] sm:$0xff]
    %v134 = vld [vmem:[%s122 + $0x58] sm:$0xff]
    %v135 = vld [vmem:[%s122 + $0x60] sm:$0xff]
    %v136 = vld [vmem:[%s122 + $0x68] sm:$0xff]
    %v137 = vld [vmem:[%s122 + $0x70] sm:$0xff]
    %v138 = vld [vmem:[%s122 + $0x78] sm:$0xff]
    %139 = vmatprep.subr.mxu0 0.0
    %140 = vmatpush1.msra.mxu0 %v123
    %141 = vmatprep.subr.mxu0 0.0
    %142 = vmatpush1.msra.mxu0 %v124
    %143 = vmatprep.subr.mxu0 0.0
    %144 = vmatpush1.msra.mxu0 %v125
    %145 = vmatprep.subr.mxu0 0.0
    %146 = vmatpush1.msra.mxu0 %v126
    %147 = vmatprep.subr.mxu0 0.0
    %148 = vmatpush1.msra.mxu0 %v127
    %149 = vmatprep.subr.mxu0 0.0
    %150 = vmatpush1.msra.mxu0 %v128
    %151 = vmatprep.subr.mxu0 0.0
    %152 = vmatpush1.msra.mxu0 %v129
    %153 = vmatprep.subr.mxu0 0.0
    %154 = vmatpush1.msra.mxu0 %v130
    %155 = vmatprep.subr.mxu0 0.0
    %156 = vmatpush1.msra.mxu0 %v131
    %157 = vmatprep.subr.mxu0 0.0
    %158 = vmatpush1.msra.mxu0 %v132
    %159 = vmatprep.subr.mxu0 0.0
    %160 = vmatpush1.msra.mxu0 %v133
    %161 = vmatprep.subr.mxu0 0.0
    %162 = vmatpush1.msra.mxu0 %v134
    %163 = vmatprep.subr.mxu0 0.0
    %164 = vmatpush1.msra.mxu0 %v135
    %165 = vmatprep.subr.mxu0 0.0
    %166 = vmatpush1.msra.mxu0 %v136
    %167 = vmatprep.subr.mxu0 0.0
    %168 = vmatpush1.msra.mxu0 %v137
    %169 = vmatprep.subr.mxu0 0.0
    %170 = vmatpush1.msra.mxu0 %v138
    %171 = vmatprep.subr.mxu0 0.0
    %172 = vmatpush1.msra.mxu0 0.0
    %173 = vmatprep.subr.mxu0 0.0
    %174 = vmatpush1.msra.mxu0 0.0
    %175 = vmatprep.subr.mxu0 0.0
    %176 = vmatpush1.msra.mxu0 0.0
    %177 = vmatprep.subr.mxu0 0.0
    %178 = vmatpush1.msra.mxu0 0.0
    %179 = vmatprep.subr.mxu0 0.0
    %180 = vmatpush1.msra.mxu0 0.0
    %181 = vmatprep.subr.mxu0 0.0
    %182 = vmatpush1.msra.mxu0 0.0
    %183 = vmatprep.subr.mxu0 0.0
    %184 = vmatpush1.msra.mxu0 0.0
    %185 = vmatprep.subr.mxu0 0.0
    %186 = vmatpush1.msra.mxu0 0.0
    %187 = vmatprep.subr.mxu0 0.0
    %188 = vmatpush1.msra.mxu0 0.0
    %189 = vmatprep.subr.mxu0 0.0
    %190 = vmatpush1.msra.mxu0 0.0
    %191 = vmatprep.subr.mxu0 0.0
    %192 = vmatpush1.msra.mxu0 0.0
    %193 = vmatprep.subr.mxu0 0.0
    %194 = vmatpush1.msra.mxu0 0.0
    %195 = vmatprep.subr.mxu0 0.0
    %196 = vmatpush1.msra.mxu0 0.0
    %197 = vmatprep.subr.mxu0 0.0
    %198 = vmatpush1.msra.mxu0 0.0
    %199 = vmatprep.subr.mxu0 0.0
    %200 = vmatpush1.msra.mxu0 0.0
    %201 = vmatprep.subr.mxu0 0.0
    %202 = vmatpush1.msra.mxu0 0.0
    %203 = vmatprep.mubr.f32.mxu0 0.0
    %204 = vmatmul.mubr.f32.gmra.mrb[0].mxu0 %v29
    %v205 = vpop.f32.mrb[0].mxu0
    %v206 = vadd.f32 0.0, %v205
    %v207 = vpop.f32.mrb[0].mxu0
    %208 = vmatprep.mubr.f32.mxu0 0.0
    %209 = vmatmul.mubr.f32.gmra.mrb[0].mxu0 %v30
    %v210 = vpop.f32.mrb[0].mxu0
    %v211 = vadd.f32 0.0, %v210
    %v212 = vpop.f32.mrb[0].mxu0
    %213 = vdwg.mxu0
    %v214 = vld [vmem:[%s2] sm:$0xff]
    %v215 = vld [vmem:[%s2 + $0x8] sm:$0xff]
    %v216 = vld [vmem:[%s2 + $0x10] sm:$0xff]
    %v217 = vld [vmem:[%s2 + $0x18] sm:$0xff]
    %v218 = vld [vmem:[%s2 + $0x20] sm:$0xff]
    %v219 = vld [vmem:[%s2 + $0x28] sm:$0xff]
    %v220 = vld [vmem:[%s2 + $0x30] sm:$0xff]
    %v221 = vld [vmem:[%s2 + $0x38] sm:$0xff]
    %v222 = vld [vmem:[%s2 + $0x40] sm:$0xff]
    %v223 = vld [vmem:[%s2 + $0x48] sm:$0xff]
    %v224 = vld [vmem:[%s2 + $0x50] sm:$0xff]
    %v225 = vld [vmem:[%s2 + $0x58] sm:$0xff]
    %v226 = vld [vmem:[%s2 + $0x60] sm:$0xff]
    %v227 = vld [vmem:[%s2 + $0x68] sm:$0xff]
    %v228 = vld [vmem:[%s2 + $0x70] sm:$0xff]
    %v229 = vld [vmem:[%s2 + $0x78] sm:$0xff]
    %230 = vmatprep.subr.mxu0 0.0
    %231 = vmatpush1.msra.mxu0 %v214
    %232 = vmatprep.subr.mxu0 0.0
    %233 = vmatpush1.msra.mxu0 %v215
    %234 = vmatprep.subr.mxu0 0.0
    %235 = vmatpush1.msra.mxu0 %v216
    %236 = vmatprep.subr.mxu0 0.0
    %237 = vmatpush1.msra.mxu0 %v217
    %238 = vmatprep.subr.mxu0 0.0
    %239 = vmatpush1.msra.mxu0 %v218
    %240 = vmatprep.subr.mxu0 0.0
    %241 = vmatpush1.msra.mxu0 %v219
    %242 = vmatprep.subr.mxu0 0.0
    %243 = vmatpush1.msra.mxu0 %v220
    %244 = vmatprep.subr.mxu0 0.0
    %245 = vmatpush1.msra.mxu0 %v221
    %246 = vmatprep.subr.mxu0 0.0
    %247 = vmatpush1.msra.mxu0 %v222
    %248 = vmatprep.subr.mxu0 0.0
    %249 = vmatpush1.msra.mxu0 %v223
    %250 = vmatprep.subr.mxu0 0.0
    %251 = vmatpush1.msra.mxu0 %v224
    %252 = vmatprep.subr.mxu0 0.0
    %253 = vmatpush1.msra.mxu0 %v225
    %254 = vmatprep.subr.mxu0 0.0
    %255 = vmatpush1.msra.mxu0 %v226
    %256 = vmatprep.subr.mxu0 0.0
    %257 = vmatpush1.msra.mxu0 %v227
    %258 = vmatprep.subr.mxu0 0.0
    %259 = vmatpush1.msra.mxu0 %v228
    %260 = vmatprep.subr.mxu0 0.0
    %261 = vmatpush1.msra.mxu0 %v229
    %262 = vmatprep.subr.mxu0 0.0
    %263 = vmatpush1.msra.mxu0 0.0
    %264 = vmatprep.subr.mxu0 0.0
    %265 = vmatpush1.msra.mxu0 0.0
    %266 = vmatprep.subr.mxu0 0.0
    %267 = vmatpush1.msra.mxu0 0.0
    %268 = vmatprep.subr.mxu0 0.0
    %269 = vmatpush1.msra.mxu0 0.0
    %270 = vmatprep.subr.mxu0 0.0
    %271 = vmatpush1.msra.mxu0 0.0
    %272 = vmatprep.subr.mxu0 0.0
    %273 = vmatpush1.msra.mxu0 0.0
    %274 = vmatprep.subr.mxu0 0.0
    %275 = vmatpush1.msra.mxu0 0.0
    %276 = vmatprep.subr.mxu0 0.0
    %277 = vmatpush1.msra.mxu0 0.0
    %278 = vmatprep.subr.mxu0 0.0
    %279 = vmatpush1.msra.mxu0 0.0
    %280 = vmatprep.subr.mxu0 0.0
    %281 = vmatpush1.msra.mxu0 0.0
    %282 = vmatprep.subr.mxu0 0.0
    %283 = vmatpush1.msra.mxu0 0.0
    %284 = vmatprep.subr.mxu0 0.0
    %285 = vmatpush1.msra.mxu0 0.0
    %286 = vmatprep.subr.mxu0 0.0
    %287 = vmatpush1.msra.mxu0 0.0
    %288 = vmatprep.subr.mxu0 0.0
    %289 = vmatpush1.msra.mxu0 0.0
    %290 = vmatprep.subr.mxu0 0.0
    %291 = vmatpush1.msra.mxu0 0.0
    %292 = vmatprep.subr.mxu0 0.0
    %293 = vmatpush1.msra.mxu0 0.0
    %294 = vmatprep.mubr.f32.mxu0 0.0
    %295 = vmatmul.mubr.f32.gmra.mrb[0].mxu0 %v114
    %v296 = vpop.f32.mrb[0].mxu0
    %v297 = vadd.f32 0.0, %v296
    %v298 = vpop.f32.mrb[0].mxu0
    %299 = vmatprep.mubr.f32.mxu0 0.0
    %300 = vmatmul.mubr.f32.gmra.mrb[0].mxu0 %v119
    %v301 = vpop.f32.mrb[0].mxu0
    %v302 = vadd.f32 0.0, %v301
    %v303 = vpop.f32.mrb[0].mxu0
    %304 = vdwg.mxu0
    %vm305 = vcmask 130048
    %306 = vst.msk [vmem:[#allocation5] sm:$0xff] %vm305, %v297
    %307 = vst.msk [vmem:[#allocation5 + $0x8] sm:$0xff] %vm305, %v302
    %v308 = vld [vmem:[%s2] sm:$0xff]
    %v309 = vld [vmem:[%s2 + $0x8] sm:$0xff]
    %v310 = vld [vmem:[%s2 + $0x10] sm:$0xff]
    %v311 = vld [vmem:[%s2 + $0x18] sm:$0xff]
    %v312 = vld [vmem:[%s2 + $0x20] sm:$0xff]
    %v313 = vld [vmem:[%s2 + $0x28] sm:$0xff]
    %v314 = vld [vmem:[%s2 + $0x30] sm:$0xff]
    %v315 = vld [vmem:[%s2 + $0x38] sm:$0xff]
    %v316 = vld [vmem:[%s2 + $0x40] sm:$0xff]
    %v317 = vld [vmem:[%s2 + $0x48] sm:$0xff]
    %v318 = vld [vmem:[%s2 + $0x50] sm:$0xff]
    %v319 = vld [vmem:[%s2 + $0x58] sm:$0xff]
    %v320 = vld [vmem:[%s2 + $0x60] sm:$0xff]
    %v321 = vld [vmem:[%s2 + $0x68] sm:$0xff]
    %v322 = vld [vmem:[%s2 + $0x70] sm:$0xff]
    %v323 = vld [vmem:[%s2 + $0x78] sm:$0xff]
    %324 = vmatprep.subr.mxu0 0.0
    %325 = vmatpush1.msra.mxu0 %v308
    %326 = vmatprep.subr.mxu0 0.0
    %327 = vmatpush1.msra.mxu0 %v309
    %328 = vmatprep.subr.mxu0 0.0
    %329 = vmatpush1.msra.mxu0 %v310
    %330 = vmatprep.subr.mxu0 0.0
    %331 = vmatpush1.msra.mxu0 %v311
    %332 = vmatprep.subr.mxu0 0.0
    %333 = vmatpush1.msra.mxu0 %v312
    %334 = vmatprep.subr.mxu0 0.0
    %335 = vmatpush1.msra.mxu0 %v313
    %336 = vmatprep.subr.mxu0 0.0
    %337 = vmatpush1.msra.mxu0 %v314
    %338 = vmatprep.subr.mxu0 0.0
    %339 = vmatpush1.msra.mxu0 %v315
    %340 = vmatprep.subr.mxu0 0.0
    %341 = vmatpush1.msra.mxu0 %v316
    %342 = vmatprep.subr.mxu0 0.0
    %343 = vmatpush1.msra.mxu0 %v317
    %344 = vmatprep.subr.mxu0 0.0
    %345 = vmatpush1.msra.mxu0 %v318
    %346 = vmatprep.subr.mxu0 0.0
    %347 = vmatpush1.msra.mxu0 %v319
    %348 = vmatprep.subr.mxu0 0.0
    %349 = vmatpush1.msra.mxu0 %v320
    %350 = vmatprep.subr.mxu0 0.0
    %351 = vmatpush1.msra.mxu0 %v321
    %352 = vmatprep.subr.mxu0 0.0
    %353 = vmatpush1.msra.mxu0 %v322
    %354 = vmatprep.subr.mxu0 0.0
    %355 = vmatpush1.msra.mxu0 %v323
    %356 = vmatprep.subr.mxu0 0.0
    %357 = vmatpush1.msra.mxu0 0.0
    %358 = vmatprep.subr.mxu0 0.0
    %359 = vmatpush1.msra.mxu0 0.0
    %360 = vmatprep.subr.mxu0 0.0
    %361 = vmatpush1.msra.mxu0 0.0
    %362 = vmatprep.subr.mxu0 0.0
    %363 = vmatpush1.msra.mxu0 0.0
    %364 = vmatprep.subr.mxu0 0.0
    %365 = vmatpush1.msra.mxu0 0.0
    %366 = vmatprep.subr.mxu0 0.0
    %367 = vmatpush1.msra.mxu0 0.0
    %368 = vmatprep.subr.mxu0 0.0
    %369 = vmatpush1.msra.mxu0 0.0
    %370 = vmatprep.subr.mxu0 0.0
    %371 = vmatpush1.msra.mxu0 0.0
    %372 = vmatprep.subr.mxu0 0.0
    %373 = vmatpush1.msra.mxu0 0.0
    %374 = vmatprep.subr.mxu0 0.0
    %375 = vmatpush1.msra.mxu0 0.0
    %376 = vmatprep.subr.mxu0 0.0
    %377 = vmatpush1.msra.mxu0 0.0
    %378 = vmatprep.subr.mxu0 0.0
    %379 = vmatpush1.msra.mxu0 0.0
    %380 = vmatprep.subr.mxu0 0.0
    %381 = vmatpush1.msra.mxu0 0.0
    %382 = vmatprep.subr.mxu0 0.0
    %383 = vmatpush1.msra.mxu0 0.0
    %384 = vmatprep.subr.mxu0 0.0
    %385 = vmatpush1.msra.mxu0 0.0
    %386 = vmatprep.subr.mxu0 0.0
    %387 = vmatpush1.msra.mxu0 0.0
    %388 = vmatprep.mubr.f32.mxu0 0.0
    %389 = vmatmul.mubr.f32.gmra.mrb[0].mxu0 %v206
    %v390 = vpop.f32.mrb[0].mxu0
    %v391 = vadd.f32 0.0, %v390
    %v392 = vpop.f32.mrb[0].mxu0
    %393 = vmatprep.mubr.f32.mxu0 0.0
    %394 = vmatmul.mubr.f32.gmra.mrb[0].mxu0 %v211
    %v395 = vpop.f32.mrb[0].mxu0
    %v396 = vadd.f32 0.0, %v395
    %v397 = vpop.f32.mrb[0].mxu0
    %398 = vdwg.mxu0
    %s399 = scalar_lea.vmem [#allocation5], 16
    %400 = vst.msk [vmem:[%s399] sm:$0xff] %vm305, %v391
    %401 = vst.msk [vmem:[%s399 + $0x8] sm:$0xff] %vm305, %v396
    // Predicated region
    $region18: #{tpu_custom_call.1} parent=1 // pred_check
      _
    $region19: #{tpu_custom_call.1} parent=1 // pred_check_branch
      %403 = sbr.rel (0) target = $region21
    $region20: #{tpu_custom_call.1} parent=1 // pred_region
      %s405 = ssub.s32 512, 512
      %406 = vsyncadd [#allocation4], %s405
      %s407 = sshll.u32 [#allocation5], 4
      %s408 = int_to_ptr.vmem [resolvable:$true] %s407
      %413 = dma.vmem_to_hbm [thread:$0]  %s408, 512, %s3, [#allocation4], 128, 128, 8
    $region21: #{tpu_custom_call.1} parent=1 // pred_fallthru
      _
    // Predicated region
    $region22: #{tpu_custom_call.1} parent=1 // pred_check
      _
    $region23: #{tpu_custom_call.1} parent=1 // pred_check_branch
      %415 = sbr.rel (0) target = $region25
    $region24: #{tpu_custom_call.1} parent=1 // pred_region
      %416 = dma.done [#allocation4], 512
    $region25: #{tpu_custom_call.1} parent=1 // pred_fallthru
      _
    %417 = vsyncpa [#allocation3], 1
    %418 = vsyncpa [#allocation4], 1

</llo_original>
